<compile_context>
chip_gen: v5e
topology: v5e:2x2
jax: 0.10.0
libtpu: 0.0.40
codegen_flags: <defaults>
</compile_context>

<pallas_src>
import math
import functools

import jax
import jax.numpy as jnp
from jax import lax
from jax.experimental import pallas as pl
from jax.experimental.pallas import tpu as pltpu


def make_pe(max_len, d_model, dtype=jnp.float32):
    """Deterministic positional-encoding buffer, same formula as the module."""
    position = jnp.arange(max_len, dtype=jnp.float32)[:, None]            # (L, 1)
    div_term = jnp.exp(
        jnp.arange(0, d_model, 2, dtype=jnp.float32)
        * (-math.log(10000.0) / d_model)
    )                                                                     # (D/2,)
    pe = jnp.zeros((max_len, d_model), jnp.float32)
    pe = pe.at[:, 0::2].set(jnp.sin(position * div_term))
    pe = pe.at[:, 1::2].set(jnp.cos(position * div_term))
    return pe.astype(dtype)


def _pe_dropout_kernel(seed_ref, x_ref, pe_ref, o_ref, *, p, apply_dropout,
                       batch_stride, lane_stride, tile_lanes):
    # x_ref/o_ref: (B, tF) or (B, sub, tC) tile; pe_ref: (1, ...) -> broadcast add.
    # Add (and keep-scaling) computed in f32 so bf16 inputs get an exact 1/(1-p).
    y = x_ref[...].astype(jnp.float32) + pe_ref[...].astype(jnp.float32)

    if apply_dropout and p > 0.0:
        shape = x_ref.shape
        nd = len(shape)
        c0 = pl.program_id(0) * tile_lanes                  # lane-axis offset of this tile
        c = lax.broadcasted_iota(jnp.int32, shape, nd - 1) + c0
        if nd == 3:                                         # sublane-packed layout
            r = lax.broadcasted_iota(jnp.int32, shape, 1)
            feat = r * jnp.int32(lane_stride) + c
        else:
            feat = c
        b = lax.broadcasted_iota(jnp.int32, shape, 0)
        # Unique element id (int32 wraparound for >2^31 elements is benign:
        # ids stay unique mod 2^32).
        flat = b * jnp.int32(batch_stride) + feat

        # Stateless 2-round integer mix (half the VALU ops of a murmur
        # finalizer); deterministic regardless of grid order -> "parallel" safe.
        h = (flat.astype(jnp.uint32) ^ seed_ref[0].astype(jnp.uint32)) \
            * jnp.uint32(0x9E3779B1)
        h = h ^ (h >> 16)
        h = h * jnp.uint32(0x85EBCA6B)

        r31 = (h >> 1).astype(jnp.int32)                    # uniform in [0, 2^31)
        thresh = jnp.int32(int(round(p * 2147483648.0)))    # drop iff r31 < thresh
        scale = jnp.float32(1.0 / (1.0 - p))
        y = jnp.where(r31 >= thresh, y * scale, jnp.zeros_like(y))

    o_ref[...] = y.astype(o_ref.dtype)


def _pick_lane_tile(n_lanes, per_col_bytes, *, budget_bytes=8 << 20, min_tiles=4):
    """Lane tile (multiple of 128) such that the double-buffered working set,
    *including sublane padding* (per_col_bytes already accounts for it), stays
    within `budget_bytes` -- safe under the 16 MiB scoped-VMEM default on v5e
    and the 32 MiB defaults on v6e/v7x -- while keeping several grid steps
    (each >= 512 lanes) so the pipeline can overlap DMA with compute and the
    "parallel" grid axis can be sharded across v7x's two TensorCores."""
    if n_lanes <= 128:
        return n_lanes
    t_budget = max(128, (budget_bytes // per_col_bytes) // 128 * 128)
    t_split = max(512, ((n_lanes + min_tiles - 1) // min_tiles) // 128 * 128)
    t = min(t_budget, t_split)
    if t >= n_lanes:
        return n_lanes           # single full-extent block (always layout-legal)
    return t                     # multiple of 128; ragged last block is masked


def positional_encoding(x, pe, *, p=0.1, train=True, seed=0):
    """x: (B, S, D) array. pe: (max_len, D) buffer. Returns dropout(x + pe[:S])."""
    B, S, D = x.shape
    F = S * D
    dtype = x.dtype
    itemsize = jnp.dtype(dtype).itemsize
    sub = {4: 8, 2: 16, 1: 32}.get(itemsize, 8)     # sublane tile for this dtype

    pe_flat = pe[:S, :].astype(dtype).reshape(1, F)
    x_flat = x.reshape(B, F)

    # Sublane packing: present (B, sub, C) blocks when F splits cleanly into
    # `sub` rows of >=128 lanes each, so small-batch blocks still fill whole
    # sublanes (no 4-8x VMEM padding / wasted VPU throughput).
    pack = (F % (sub * 128) == 0)
    if pack:
        C = F // sub
        x_in = x_flat.reshape(B, sub, C)
        pe_in = pe_flat.reshape(1, sub, C)
        x_rows_padded = B * sub                      # second-minor dim == sub: no padding
        pe_rows_padded = sub
        batch_stride, lane_stride = sub * C, C
    else:
        C = F
        x_in, pe_in = x_flat, pe_flat
        x_rows_padded = -(-B // sub) * sub           # (B, tF) block pads B up to sub
        pe_rows_padded = sub
        batch_stride, lane_stride = F, 0

    # Real double-buffered VMEM bytes per lane column: x + out (each x_rows_padded
    # sublanes) + pe (pe_rows_padded sublanes), all x2 for double buffering.
    # NOTE: for extremely large B (>~4K rows) this clamps at a 128-lane tile and
    # could still exceed scoped VMEM; such shapes would need a batch grid axis.
    per_col_bytes = 2 * (2 * x_rows_padded + pe_rows_padded) * itemsize
    tile = _pick_lane_tile(C, per_col_bytes)
    n_tiles = pl.cdiv(C, tile)

    if pack:
        x_spec = pl.BlockSpec((B, sub, tile), lambda i, s: (0, 0, i))
        pe_spec = pl.BlockSpec((1, sub, tile), lambda i, s: (0, 0, i))
        out_spec = pl.BlockSpec((B, sub, tile), lambda i, s: (0, 0, i))
    else:
        x_spec = pl.BlockSpec((B, tile), lambda i, s: (0, i))
        pe_spec = pl.BlockSpec((1, tile), lambda i, s: (0, i))
        out_spec = pl.BlockSpec((B, tile), lambda i, s: (0, i))

    kernel = functools.partial(
        _pe_dropout_kernel,
        p=float(p), apply_dropout=bool(train),
        batch_stride=batch_stride, lane_stride=lane_stride, tile_lanes=tile,
    )

    cost = pl.CostEstimate(
        flops=int((2 if (train and p > 0.0) else 1) * B * F),
        transcendentals=0,
        bytes_accessed=int((2 * B + 1) * F * itemsize),
    )

    out = pl.pallas_call(
        kernel,
        out_shape=jax.ShapeDtypeStruct(x_in.shape, dtype),
        grid_spec=pltpu.PrefetchScalarGridSpec(
            num_scalar_prefetch=1,                  # dropout seed lives in SMEM
            grid=(n_tiles,),
            in_specs=[x_spec, pe_spec],
            out_specs=out_spec,
        ),
        compiler_params=pltpu.CompilerParams(
            dimension_semantics=("parallel",),      # tiles are independent
        ),
        cost_estimate=cost,
    )(jnp.asarray([seed], jnp.int32), x_in, pe_in)

    return out.reshape(B, S, D)


if __name__ == "__main__":
    dropout_p = 0.1

    # --- small shape straight from the module spec (2-D fallback path) ---
    d_model, max_len = 32, 256
    batch, seq = 2, 8
    key = jax.random.PRNGKey(0)
    x = jax.random.normal(key, (batch, seq, d_model), dtype=jnp.float32)
    pe = make_pe(max_len, d_model)

    out_eval = jax.block_until_ready(
        positional_encoding(x, pe, p=dropout_p, train=False))
    ref_eval = x + pe[None, :seq, :]
    assert out_eval.shape == (batch, seq, d_model)
    assert jnp.allclose(out_eval, ref_eval, atol=1e-6), "eval-mode mismatch (small)"

    out_train = jax.block_until_ready(
        positional_encoding(x, pe, p=dropout_p, train=True, seed=1234))
    scaled_ref = ref_eval / (1.0 - dropout_p)
    ok = jnp.all((out_train == 0.0)
                 | jnp.isclose(out_train, scaled_ref, atol=1e-5, rtol=1e-5))
    assert bool(ok), "train-mode values mismatch (small)"

    # --- slightly larger shape exercising the sublane-packed multi-tile path ---
    d2, seq2, batch2 = 64, 128, 2
    x2 = jax.random.normal(jax.random.PRNGKey(0), (batch2, seq2, d2), jnp.float32)
    pe2 = make_pe(256, d2)

    out2 = jax.block_until_ready(
        positional_encoding(x2, pe2, p=dropout_p, train=False))
    ref2 = x2 + pe2[None, :seq2, :]
    assert jnp.allclose(out2, ref2, atol=1e-6), "eval-mode mismatch (packed path)"

    out2t = jax.block_until_ready(
        positional_encoding(x2, pe2, p=dropout_p, train=True, seed=7))
    scaled2 = ref2 / (1.0 - dropout_p)
    ok2 = jnp.all((out2t == 0.0)
                  | jnp.isclose(out2t, scaled2, atol=1e-5, rtol=1e-5))
    assert bool(ok2), "train-mode values mismatch (packed path)"
    drop_frac = float(jnp.mean(out2t == 0.0))
    assert 0.03 < drop_frac < 0.25, f"drop fraction looks wrong: {drop_frac}"

    print("KERNEL_OK")
</pallas_src>

<mosaic_0001>
module attributes {stable_mosaic.version = 11 : i64} {
  func.func @_pe_dropout_kernel(%arg0: i32, %arg1: memref<1xi32, #tpu.memory_space<smem>>, %arg2: memref<2x256xf32, #tpu.memory_space<vmem>>, %arg3: memref<1x256xf32, #tpu.memory_space<vmem>>, %arg4: memref<2x256xf32, #tpu.memory_space<vmem>>) attributes {dimension_semantics = [#tpu.dimension_semantics<parallel>], iteration_bounds = array<i64: 1>, scalar_prefetch = 1 : i64, scratch_operands = 0 : i64, tpu.core_type = #tpu.core_type<tc>, window_params = [{transform_indices = @transform_0, window_bounds = array<i64: 2, 256>}, {transform_indices = @transform_1, window_bounds = array<i64: 1, 256>}, {transform_indices = @transform_2, window_bounds = array<i64: 2, 256>}]} {
    %c0 = arith.constant 0 : index
    %c0_0 = arith.constant 0 : index
    %0 = vector.load %arg2[%c0, %c0_0] : memref<2x256xf32, #tpu.memory_space<vmem>>, vector<2x256xf32>
    %c0_1 = arith.constant 0 : index
    %c0_2 = arith.constant 0 : index
    %1 = vector.load %arg3[%c0_1, %c0_2] : memref<1x256xf32, #tpu.memory_space<vmem>>, vector<1x256xf32>
    %2 = vector.broadcast %1 : vector<1x256xf32> to vector<2x256xf32>
    %3 = arith.addf %0, %2 : vector<2x256xf32>
    %c0_3 = arith.constant 0 : index
    %c0_4 = arith.constant 0 : index
    %4 = vector.load %arg4[%c0_3, %c0_4] : memref<2x256xf32, #tpu.memory_space<vmem>>, vector<2x256xf32>
    tpu.vector_store %arg4[%c0_3, %c0_4], %3 {strides = array<i32>} : memref<2x256xf32, #tpu.memory_space<vmem>>, vector<2x256xf32>,
    return
  }
  func.func @transform_0(%arg0: i32, %arg1: memref<1xi32, #tpu.memory_space<smem>>) -> (i32, i32) {
    %c0_i32 = arith.constant 0 : i32
    %c0_i32_0 = arith.constant 0 : i32
    return %c0_i32, %arg0 : i32, i32
  }
  func.func @transform_1(%arg0: i32, %arg1: memref<1xi32, #tpu.memory_space<smem>>) -> (i32, i32) {
    %c0_i32 = arith.constant 0 : i32
    %c0_i32_0 = arith.constant 0 : i32
    return %c0_i32, %arg0 : i32, i32
  }
  func.func @transform_2(%arg0: i32, %arg1: memref<1xi32, #tpu.memory_space<smem>>) -> (i32, i32) {
    %c0_i32 = arith.constant 0 : i32
    %c0_i32_0 = arith.constant 0 : i32
    return %c0_i32, %arg0 : i32, i32
  }
}

</mosaic_0001>

<llo_original>
// kernel: tpu_custom_call.1
$region0: #{tpu_custom_call.1}
  #allocation0 [shape = 'u32[]', space=smem, size = 0x4, offset = 0x4, fixed_abs, tag = 'smem constant byte address 0x4 - core index']
  #allocation1 [shape = 'u32[72,128]{1,0:T(1,128)}', space=vmem, size = 0x9000, scoped, tag = 'internal scratch']
  #allocation2 [shape = 's32[1]{0}', space=sflag, size = 0x4, scoped, tag = 'scoped memory for tpu_custom_call.1']
  #allocation3 [shape = 's32[1]{0:T(128)S(6)}', space=smem, size = 0x200, scoped, tag = 'prefetched SMEM operand 0']
  %s0 = inlined_call_operand.<no memory space> [shape: s32[1], index: 0, kind: input, shape index: {}]
  %s1 = inlined_call_operand.hbm [shape: f32[2,256], index: 1, kind: input, shape index: {}]
  %s2 = inlined_call_operand.vmem [shape: f32[1,256], index: 2, kind: input, shape index: {}]
  %s3 = inlined_call_operand.hbm [shape: f32[2,256], index: 3, kind: output, shape index: {}]
  %s4 = sld [smem:[#allocation0]]
  $region22: #{tpu_custom_call.1} parent=0
    _
  %s6 = ssub.s32 1, %s4
  %s7 = scalar_select 0, %s6, %s4
  %8 = sst [smem:[#allocation3]] %s0
  $region1: #{tpu_custom_call.1} parent=0
    #allocation4 [shape = 'u8[2048]{0}', space=vmem, size = 0x800, scoped, tag = 'input window, operand 1, single buffered']
    #allocation5 [shape = 's32[1]{0}', space=sflag, size = 0x4, scoped, tag = 'scoped memory for tpu_custom_call.1']
    #allocation6 [shape = 's32[1]{0}', space=sflag, size = 0x4, scoped, tag = 'scoped memory for tpu_custom_call.1']
    #allocation7 [shape = 'u8[2048]{0}', space=vmem, size = 0x800, scoped, tag = 'output window, operand 0, single buffered']
    %9 = vsyncpa [#allocation5], 0
    %10 = vsyncpa [#allocation6], 0
    // Predicated region
    $region2: #{tpu_custom_call.1} parent=1 // pred_check
      _
    $region3: #{tpu_custom_call.1} parent=1 // pred_check_branch
      %12 = sbr.rel (0) target = $region5
    $region4: #{tpu_custom_call.1} parent=1 // pred_region
      %14 = vsyncadd [#allocation5], 0
      %s16 = sshll.u32 %s1, 4
      %s17 = int_to_ptr.hbm [resolvable:$true] %s16
      %s18 = sshll.u32 [#allocation4], 4
      %s19 = int_to_ptr.vmem [resolvable:$true] %s18
      %21 = dma.hbm_to_vmem [thread:$0]  %s17, 64, %s19, [#allocation5]
    $region5: #{tpu_custom_call.1} parent=1 // pred_fallthru
      _
    // Predicated region
    $region6: #{tpu_custom_call.1} parent=1 // pred_check
      _
    $region7: #{tpu_custom_call.1} parent=1 // pred_check_branch
      %23 = sbr.rel (0) target = $region9
    $region8: #{tpu_custom_call.1} parent=1 // pred_region
      _
    $region9: #{tpu_custom_call.1} parent=1 // pred_fallthru
      _
    // Predicated region
    $region10: #{tpu_custom_call.1} parent=1 // pred_check
      _
    $region11: #{tpu_custom_call.1} parent=1 // pred_check_branch
      %25 = sbr.rel (0) target = $region13
    $region12: #{tpu_custom_call.1} parent=1 // pred_region
      %27 = dma.done [#allocation5], 64
    $region13: #{tpu_custom_call.1} parent=1 // pred_fallthru
      _
    %v28 = vld [vmem:[#allocation4] sm:$0xf]
    %v29 = vld [vmem:[%s2] sm:$0x3]
    %v31 = vperm.slane %v29, 0
    %v32 = vperm.slane %v29, 1
    %v33 = vrot.slane %v32, 6
    %vm34 = vcmask 1041408
    %v35 = vsel %vm34, %v31, %v33
    %v37 = vadd.f32 %v28, %v35
    %38 = vst [vmem:[#allocation7] sm:$0xf] %v37
    // Predicated region
    $region14: #{tpu_custom_call.1} parent=1 // pred_check
      _
    $region15: #{tpu_custom_call.1} parent=1 // pred_check_branch
      %40 = sbr.rel (0) target = $region17
    $region16: #{tpu_custom_call.1} parent=1 // pred_region
      %42 = vsyncadd [#allocation6], 0
      %s44 = sshll.u32 [#allocation7], 4
      %s45 = int_to_ptr.vmem [resolvable:$true] %s44
      %s46 = sshll.u32 %s3, 4
      %s47 = int_to_ptr.hbm [resolvable:$true] %s46
      %49 = dma.vmem_to_hbm [thread:$0]  %s45, 64, %s47, [#allocation6]
    $region17: #{tpu_custom_call.1} parent=1 // pred_fallthru
      _
    // Predicated region
    $region18: #{tpu_custom_call.1} parent=1 // pred_check
      _
    $region19: #{tpu_custom_call.1} parent=1 // pred_check_branch
      %51 = sbr.rel (0) target = $region21
    $region20: #{tpu_custom_call.1} parent=1 // pred_region
      %53 = dma.done [#allocation6], 64
    $region21: #{tpu_custom_call.1} parent=1 // pred_fallthru
      _
    %54 = vsyncpa [#allocation5], 1
    %55 = vsyncpa [#allocation6], 1

</llo_original>
